<compile_context>
chip_gen: v7x
topology: tpu7x:2x2x1
jax: 0.10.0
libtpu: 0.0.40
codegen_flags: <defaults>
</compile_context>

<pallas_src>
import functools

import jax
import jax.numpy as jnp
from jax.experimental import pallas as pl
from jax.experimental.pallas import tpu as pltpu

HIDDEN = 64          # logical hidden width of the PyTorch module
HIDDEN_PAD = 128     # padded hidden width (lane-dense, MXU-native)
OUT_PAD = 128        # padded action width (lane-dense output stores)
NEG_BIG = -1e30      # bias for padded action lanes -> softmax prob exactly 0


def _round_up(x, m):
    return ((x + m - 1) // m) * m


def learner_kernel(x_ref, w1_ref, b1_ref, w2_ref, b2_ref, o_ref):
    # x arrives f32; cast to the weight dtype in-kernel (VPU cast hides under
    # the DMA) so HBM only ever carries f32 x once.
    x = x_ref[...].astype(w1_ref.dtype)

    # layer1: Linear(n_features, 128) + ReLU   (bf16 operands, f32 accumulate)
    h = jnp.dot(x, w1_ref[...], preferred_element_type=jnp.float32)
    h = jnp.maximum(h + b1_ref[...], 0.0)                 # (TILE_B, 128) f32

    # layer2: Linear(128, 128)  (padded action lanes have zero weights)
    logits = jnp.dot(h.astype(w2_ref.dtype), w2_ref[...],
                     preferred_element_type=jnp.float32)
    logits = logits + b2_ref[...]                         # padded lanes -> -1e30

    # numerically-stable softmax over the (padded) last dim; padded lanes give
    # exp(-1e30 - m) == 0 so they contribute nothing to the denominator.
    m = jnp.max(logits, axis=-1, keepdims=True)
    e = jnp.exp(logits - m)
    denom = jnp.sum(e, axis=-1, keepdims=True)
    # exact divide (not pl.reciprocal(approx=True)) so rows sum to 1 exactly.
    o_ref[...] = (e / denom).astype(o_ref.dtype)


def pad_params(w1, b1, w2, b2, *, use_bf16=True):
    """Run ONCE at init: pad hidden -> 128 (exact zeros) and actions -> 128
    (zero weights, -1e30 bias) so intermediates and output are lane-dense.

    w1: (n_features, 64); b1: (1, 64); w2: (64, n_actions); b2: (1, n_actions).
    """
    F = w1.shape[0]
    n_actions = w2.shape[1]
    cdt = jnp.bfloat16 if use_bf16 else jnp.float32
    w1p = jnp.zeros((F, HIDDEN_PAD), jnp.float32).at[:, :HIDDEN].set(w1).astype(cdt)
    b1p = jnp.zeros((1, HIDDEN_PAD), jnp.float32).at[:, :HIDDEN].set(b1)
    w2p = (jnp.zeros((HIDDEN_PAD, OUT_PAD), jnp.float32)
           .at[:HIDDEN, :n_actions].set(w2).astype(cdt))
    b2p = jnp.full((1, OUT_PAD), NEG_BIG, jnp.float32).at[:, :n_actions].set(b2)
    return w1p, b1p, w2p, b2p


@functools.partial(jax.jit, static_argnames=("n_actions", "tile_b"))
def learner_forward(x, w1p, b1p, w2p, b2p, *, n_actions, tile_b=None):
    """x: (B, n_features) f32; padded params from `pad_params`."""
    B, F = x.shape

    # Single grid step for small B (per-step overhead dominates 2-step grids);
    # 512-row tiles for large B (near HBM roofline, still tiny vs VMEM).
    if tile_b is None:
        tile_b = min(_round_up(B, 8), 512)
    tile_b = min(tile_b, _round_up(B, 8))
    b_pad = _round_up(B, tile_b)

    xp = x
    if b_pad != B:
        xp = jnp.zeros((b_pad, F), x.dtype).at[:B].set(x)

    grid = (b_pad // tile_b,)
    w_itemsize = jnp.dtype(w1p.dtype).itemsize
    cost = pl.CostEstimate(
        flops=2 * b_pad * (F * HIDDEN_PAD + HIDDEN_PAD * OUT_PAD),
        transcendentals=b_pad * OUT_PAD,
        bytes_accessed=(b_pad * F * 4                                         # x (f32)
                        + (F * HIDDEN_PAD + HIDDEN_PAD * OUT_PAD) * w_itemsize  # W
                        + (HIDDEN_PAD + OUT_PAD) * 4                          # biases
                        + b_pad * OUT_PAD * 4),                               # out
    )

    out = pl.pallas_call(
        learner_kernel,
        out_shape=jax.ShapeDtypeStruct((b_pad, OUT_PAD), jnp.float32),
        grid=grid,
        in_specs=[
            pl.BlockSpec((tile_b, F), lambda i: (i, 0)),        # x: streamed tiles
            pl.BlockSpec((F, HIDDEN_PAD), lambda i: (0, 0)),    # weights stay resident
            pl.BlockSpec((1, HIDDEN_PAD), lambda i: (0, 0)),
            pl.BlockSpec((HIDDEN_PAD, OUT_PAD), lambda i: (0, 0)),
            pl.BlockSpec((1, OUT_PAD), lambda i: (0, 0)),
        ],
        out_specs=pl.BlockSpec((tile_b, OUT_PAD), lambda i: (i, 0)),
        compiler_params=pltpu.CompilerParams(
            dimension_semantics=("parallel",)),                 # megacore on v7x
        cost_estimate=cost,
    )(xp, w1p, b1p, w2p, b2p)

    # strip batch/action padding (padded action lanes are exactly 0)
    return out[:B, :n_actions]


def init_params(key, n_features, n_actions, hidden=HIDDEN):
    """Synthetic init matching the PyTorch module: weights ~ N(0, 0.1)
    (.normal_(0, 0.1)); biases use PyTorch's default uniform(-1/sqrt(fan_in), ...)."""
    k1, k2, k3, k4 = jax.random.split(key, 4)
    # PyTorch Linear weight is (out, in); store transposed (in, out) for x @ W.
    w1 = (0.1 * jax.random.normal(k1, (hidden, n_features), jnp.float32)).T
    w2 = (0.1 * jax.random.normal(k2, (n_actions, hidden), jnp.float32)).T
    bound1 = 1.0 / jnp.sqrt(jnp.float32(n_features))
    bound2 = 1.0 / jnp.sqrt(jnp.float32(hidden))
    b1 = jax.random.uniform(k3, (1, hidden), jnp.float32, -bound1, bound1)
    b2 = jax.random.uniform(k4, (1, n_actions), jnp.float32, -bound2, bound2)
    return w1, b1, w2, b2


def reference_forward(x, w1, b1, w2, b2, use_bf16=True):
    """Plain-JAX reference mirroring the kernel's matmul operand dtypes
    (bf16 MXU operands, f32 accumulate/elementwise/softmax)."""
    cdt = jnp.bfloat16 if use_bf16 else jnp.float32
    h = jnp.dot(x.astype(cdt), w1.astype(cdt),
                preferred_element_type=jnp.float32) + b1
    h = jnp.maximum(h, 0.0)
    logits = jnp.dot(h.astype(cdt), w2.astype(cdt),
                     preferred_element_type=jnp.float32) + b2
    return jax.nn.softmax(logits, axis=-1)


if __name__ == "__main__":
    B, N_FEATURES, N_ACTIONS = 128, 32, 8

    key = jax.random.PRNGKey(0)
    kx, kp = jax.random.split(key)
    x = jax.random.normal(kx, (B, N_FEATURES), jnp.float32)
    w1, b1, w2, b2 = init_params(kp, N_FEATURES, N_ACTIONS)

    # padding/casting of weights happens once here, not per forward call
    w1p, b1p, w2p, b2p = pad_params(w1, b1, w2, b2, use_bf16=True)

    out = learner_forward(x, w1p, b1p, w2p, b2p, n_actions=N_ACTIONS)
    out = jax.block_until_ready(out)

    ref = reference_forward(x, w1, b1, w2, b2, use_bf16=True)
    assert out.shape == (B, N_ACTIONS)
    # bf16 MXU operands -> compare at 1e-3; softmax itself is exact f32
    assert jnp.allclose(out, ref, atol=1e-3, rtol=1e-3), \
        float(jnp.max(jnp.abs(out - ref)))
    assert jnp.allclose(jnp.sum(out, axis=-1), 1.0, atol=1e-3)

    print("KERNEL_OK")
</pallas_src>

<mosaic_0001>
module attributes {stable_mosaic.version = 11 : i64} {
  func.func @learner_kernel(%arg0: i32, %arg1: memref<128x32xf32, #tpu.memory_space<vmem>>, %arg2: memref<32x128xbf16, #tpu.memory_space<vmem>>, %arg3: memref<1x128xf32, #tpu.memory_space<vmem>>, %arg4: memref<128x128xbf16, #tpu.memory_space<vmem>>, %arg5: memref<1x128xf32, #tpu.memory_space<vmem>>, %arg6: memref<128x128xf32, #tpu.memory_space<vmem>>) attributes {dimension_semantics = [#tpu.dimension_semantics<parallel>], iteration_bounds = array<i64: 1>, scalar_prefetch = 0 : i64, scratch_operands = 0 : i64, tpu.core_type = #tpu.core_type<tc>, window_params = [{transform_indices = @transform_0, window_bounds = array<i64: 128, 32>}, {pipeline_mode = #tpu.pipeline_mode<synchronous>, transform_indices = @transform_1, window_bounds = array<i64: 32, 128>}, {pipeline_mode = #tpu.pipeline_mode<synchronous>, transform_indices = @transform_2, window_bounds = array<i64: 1, 128>}, {pipeline_mode = #tpu.pipeline_mode<synchronous>, transform_indices = @transform_3, window_bounds = array<i64: 128, 128>}, {pipeline_mode = #tpu.pipeline_mode<synchronous>, transform_indices = @transform_4, window_bounds = array<i64: 1, 128>}, {transform_indices = @transform_5, window_bounds = array<i64: 128, 128>}]} {
    %c0 = arith.constant 0 : index
    %c0_0 = arith.constant 0 : index
    %0 = vector.load %arg1[%c0, %c0_0] : memref<128x32xf32, #tpu.memory_space<vmem>>, vector<128x32xf32>
    %1 = arith.truncf %0 : vector<128x32xf32> to vector<128x32xbf16>
    %c0_1 = arith.constant 0 : index
    %c0_2 = arith.constant 0 : index
    %2 = vector.load %arg2[%c0_1, %c0_2] : memref<32x128xbf16, #tpu.memory_space<vmem>>, vector<32x128xbf16>
    %cst = arith.constant dense<0.000000e+00> : vector<128x128xf32>
    %3 = tpu.matmul %1, %2, %cst {dimension_numbers = #tpu.dot_dimension_numbers<[1], [0], [0], [1], [0, 0, 1, 1], [], []>} : vector<128x32xbf16>, vector<32x128xbf16>, vector<128x128xf32> -> vector<128x128xf32>
    %c0_3 = arith.constant 0 : index
    %c0_4 = arith.constant 0 : index
    %4 = vector.load %arg3[%c0_3, %c0_4] : memref<1x128xf32, #tpu.memory_space<vmem>>, vector<1x128xf32>
    %5 = vector.broadcast %4 : vector<1x128xf32> to vector<128x128xf32>
    %6 = arith.addf %3, %5 : vector<128x128xf32>
    %cst_5 = arith.constant 0.000000e+00 : f32
    %7 = vector.broadcast %cst_5 : f32 to vector<128x128xf32>
    %8 = arith.maximumf %6, %7 : vector<128x128xf32>
    %9 = arith.truncf %8 : vector<128x128xf32> to vector<128x128xbf16>
    %c0_6 = arith.constant 0 : index
    %c0_7 = arith.constant 0 : index
    %10 = vector.load %arg4[%c0_6, %c0_7] : memref<128x128xbf16, #tpu.memory_space<vmem>>, vector<128x128xbf16>
    %cst_8 = arith.constant dense<0.000000e+00> : vector<128x128xf32>
    %11 = tpu.matmul %9, %10, %cst_8 {dimension_numbers = #tpu.dot_dimension_numbers<[1], [0], [0], [1], [0, 0, 1, 1], [], []>} : vector<128x128xbf16>, vector<128x128xbf16>, vector<128x128xf32> -> vector<128x128xf32>
    %c0_9 = arith.constant 0 : index
    %c0_10 = arith.constant 0 : index
    %12 = vector.load %arg5[%c0_9, %c0_10] : memref<1x128xf32, #tpu.memory_space<vmem>>, vector<1x128xf32>
    %13 = vector.broadcast %12 : vector<1x128xf32> to vector<128x128xf32>
    %14 = arith.addf %11, %13 : vector<128x128xf32>
    %cst_11 = arith.constant dense<0xFF800000> : vector<128xf32>
    %15 = vector.multi_reduction <maximumf>, %14, %cst_11 [1] : vector<128x128xf32> to vector<128xf32>
    %16 = vector.shape_cast %15 : vector<128xf32> to vector<128x1xf32>
    %17 = vector.broadcast %16 : vector<128x1xf32> to vector<128x128xf32>
    %18 = arith.subf %14, %17 : vector<128x128xf32>
    %19 = math.exp %18 : vector<128x128xf32>
    %cst_12 = arith.constant dense<0.000000e+00> : vector<128xf32>
    %20 = vector.multi_reduction <add>, %19, %cst_12 [1] : vector<128x128xf32> to vector<128xf32>
    %21 = vector.shape_cast %20 : vector<128xf32> to vector<128x1xf32>
    %22 = vector.broadcast %21 : vector<128x1xf32> to vector<128x128xf32>
    %23 = arith.divf %19, %22 : vector<128x128xf32>
    %c0_13 = arith.constant 0 : index
    %c0_14 = arith.constant 0 : index
    %24 = vector.load %arg6[%c0_13, %c0_14] : memref<128x128xf32, #tpu.memory_space<vmem>>, vector<128x128xf32>
    tpu.vector_store %arg6[%c0_13, %c0_14], %23 {strides = array<i32>} : memref<128x128xf32, #tpu.memory_space<vmem>>, vector<128x128xf32>,
    return
  }
  func.func @transform_0(%arg0: i32) -> (i32, i32) {
    %c0_i32 = arith.constant 0 : i32
    %c0_i32_0 = arith.constant 0 : i32
    return %arg0, %c0_i32 : i32, i32
  }
  func.func @transform_1(%arg0: i32) -> (i32, i32) {
    %c0_i32 = arith.constant 0 : i32
    %c0_i32_0 = arith.constant 0 : i32
    %c0_i32_1 = arith.constant 0 : i32
    return %c0_i32, %c0_i32_0 : i32, i32
  }
  func.func @transform_2(%arg0: i32) -> (i32, i32) {
    %c0_i32 = arith.constant 0 : i32
    %c0_i32_0 = arith.constant 0 : i32
    %c0_i32_1 = arith.constant 0 : i32
    return %c0_i32, %c0_i32_0 : i32, i32
  }
  func.func @transform_3(%arg0: i32) -> (i32, i32) {
    %c0_i32 = arith.constant 0 : i32
    %c0_i32_0 = arith.constant 0 : i32
    %c0_i32_1 = arith.constant 0 : i32
    return %c0_i32, %c0_i32_0 : i32, i32
  }
  func.func @transform_4(%arg0: i32) -> (i32, i32) {
    %c0_i32 = arith.constant 0 : i32
    %c0_i32_0 = arith.constant 0 : i32
    %c0_i32_1 = arith.constant 0 : i32
    return %c0_i32, %c0_i32_0 : i32, i32
  }
  func.func @transform_5(%arg0: i32) -> (i32, i32) {
    %c0_i32 = arith.constant 0 : i32
    %c0_i32_0 = arith.constant 0 : i32
    return %arg0, %c0_i32 : i32, i32
  }
}

</mosaic_0001>

<llo_original>
// kernel: learner_forward.1
$region0: #{learner_forward.1}
  #allocation0 [shape = 'u32[]', space=smem, size = 0x4, offset = 0x4, fixed_abs, tag = 'smem constant byte address 0x4 - core index']
  #allocation1 [shape = 'u32[144,128]{1,0:T(1,128)}', space=vmem, size = 0x12000, scoped, tag = 'internal scratch']
  %s0 = inlined_call_operand.vmem [shape: f32[128,32], index: 0, kind: input, shape index: {}]
  %s1 = inlined_call_operand.vmem [shape: bf16[32,128], index: 1, kind: input, shape index: {}]
  %s2 = inlined_call_operand.vmem [shape: f32[1,128], index: 2, kind: input, shape index: {}]
  %s3 = inlined_call_operand.vmem [shape: bf16[128,128], index: 3, kind: input, shape index: {}]
  %s4 = inlined_call_operand.vmem [shape: f32[1,128], index: 4, kind: input, shape index: {}]
  %s5 = inlined_call_operand.vmem [shape: f32[128,128], index: 5, kind: output, shape index: {}]
  %s6 = sld [smem:[#allocation0]]
  $region30: #{learner_forward.1} parent=0
    _
  %s8 = ssub.s32 1, %s6
  %s9 = scalar_select 0, %s8, %s6
  // Predicated region
  $region2: #{learner_forward.1} parent=0 // pred_check
    _
  $region3: #{learner_forward.1} parent=0 // pred_check_branch
    %11 = sbr.rel (0) target = $region5
  $region4: #{learner_forward.1} parent=0 // pred_region
    _
  $region5: #{learner_forward.1} parent=0 // pred_fallthru
    _
  // Predicated region
  $region6: #{learner_forward.1} parent=0 // pred_check
    _
  $region7: #{learner_forward.1} parent=0 // pred_check_branch
    %13 = sbr.rel (0) target = $region9
  $region8: #{learner_forward.1} parent=0 // pred_region
    _
  $region9: #{learner_forward.1} parent=0 // pred_fallthru
    _
  // Predicated region
  $region10: #{learner_forward.1} parent=0 // pred_check
    _
  $region11: #{learner_forward.1} parent=0 // pred_check_branch
    %15 = sbr.rel (0) target = $region13
  $region12: #{learner_forward.1} parent=0 // pred_region
    _
  $region13: #{learner_forward.1} parent=0 // pred_fallthru
    _
  // Predicated region
  $region14: #{learner_forward.1} parent=0 // pred_check
    _
  $region15: #{learner_forward.1} parent=0 // pred_check_branch
    %17 = sbr.rel (0) target = $region17
  $region16: #{learner_forward.1} parent=0 // pred_region
    _
  $region17: #{learner_forward.1} parent=0 // pred_fallthru
    _
  // Predicated region
  $region18: #{learner_forward.1} parent=0 // pred_check
    _
  $region19: #{learner_forward.1} parent=0 // pred_check_branch
    %19 = sbr.rel (0) target = $region21
  $region20: #{learner_forward.1} parent=0 // pred_region
    _
  $region21: #{learner_forward.1} parent=0 // pred_fallthru
    _
  %v21 = vld [vmem:[%s0] sm:$0xff]
  %v22 = vld [vmem:[%s0 + $0x8] sm:$0xff]
  %v23 = vld [vmem:[%s0 + $0x10] sm:$0xff]
  %v24 = vld [vmem:[%s0 + $0x18] sm:$0xff]
  %v25 = vld [vmem:[%s0 + $0x20] sm:$0xff]
  %v26 = vld [vmem:[%s0 + $0x28] sm:$0xff]
  %v27 = vld [vmem:[%s0 + $0x30] sm:$0xff]
  %v28 = vld [vmem:[%s0 + $0x38] sm:$0xff]
  %v29 = vld [vmem:[%s0 + $0x40] sm:$0xff]
  %v30 = vld [vmem:[%s0 + $0x48] sm:$0xff]
  %v31 = vld [vmem:[%s0 + $0x50] sm:$0xff]
  %v32 = vld [vmem:[%s0 + $0x58] sm:$0xff]
  %v33 = vld [vmem:[%s0 + $0x60] sm:$0xff]
  %v34 = vld [vmem:[%s0 + $0x68] sm:$0xff]
  %v35 = vld [vmem:[%s0 + $0x70] sm:$0xff]
  %v36 = vld [vmem:[%s0 + $0x78] sm:$0xff]
  %v37 = vpack.c.bf16 %v22, %v21
  %v38 = vpack.c.bf16 %v24, %v23
  %v39 = vpack.c.bf16 %v26, %v25
  %v40 = vpack.c.bf16 %v28, %v27
  %v41 = vpack.c.bf16 %v30, %v29
  %v42 = vpack.c.bf16 %v32, %v31
  %v43 = vpack.c.bf16 %v34, %v33
  %v44 = vpack.c.bf16 %v36, %v35
  %v45 = vld [vmem:[%s1] sm:$0xf]
  %v46 = vld [vmem:[%s1 + $0x4] sm:$0xf]
  %v47 = vld [vmem:[%s1 + $0x8] sm:$0xf]
  %v48 = vld [vmem:[%s1 + $0xc] sm:$0xf]
  %v49 = vld [vmem:[%s2] sm:$0x1]
  %v51 = vlaneseq
  %v52 = vshrl.u32 %v51, 7
  %v53 = vsub.s32 0, %v52
  %v54 = vrot.slane %v49, %v53
  %v60 = vunpack.c.l.b16 %v45
  %v61 = vunpack.c.l.b16 %v46
  %v62 = vunpack.c.l.b16 %v47
  %v63 = vunpack.c.l.b16 %v48
  %v64 = vpack.c.b16 %v61, %v60
  %v65 = vpack.c.b16 %v63, %v62
  %vm68 = vcmask 261120
  %v70 = vsel %vm68, %v37, 0
  %v73 = vsel %vm68, %v38, 0
  %v76 = vsel %vm68, %v39, 0
  %v79 = vsel %vm68, %v40, 0
  %v82 = vsel %vm68, %v41, 0
  %v85 = vsel %vm68, %v42, 0
  %v88 = vsel %vm68, %v43, 0
  %v91 = vsel %vm68, %v44, 0
  %93 = vmatprep.subr.bf16.mxu0 0
  %94 = vmatpush1.bf16.msra.mxu0 %v64
  %95 = vmatprep.subr.bf16.mxu0 0
  %96 = vmatpush1.bf16.msra.mxu0 %v65
  %97 = vmatprep.subr.bf16.mxu0 0
  %98 = vmatpush1.bf16.msra.mxu0 0
  %99 = vmatprep.subr.bf16.mxu0 0
  %100 = vmatpush1.bf16.msra.mxu0 0
  %101 = vmatprep.subr.bf16.mxu0 0
  %102 = vmatpush1.bf16.msra.mxu0 0
  %103 = vmatprep.subr.bf16.mxu0 0
  %104 = vmatpush1.bf16.msra.mxu0 0
  %105 = vmatprep.subr.bf16.mxu0 0
  %106 = vmatpush1.bf16.msra.mxu0 0
  %107 = vmatprep.subr.bf16.mxu0 0
  %108 = vmatpush1.bf16.msra.mxu0 0
  %109 = vmatprep.subr.bf16.mxu0 0
  %110 = vmatpush1.bf16.msra.mxu0 0
  %111 = vmatprep.subr.bf16.mxu0 0
  %112 = vmatpush1.bf16.msra.mxu0 0
  %113 = vmatprep.subr.bf16.mxu0 0
  %114 = vmatpush1.bf16.msra.mxu0 0
  %115 = vmatprep.subr.bf16.mxu0 0
  %116 = vmatpush1.bf16.msra.mxu0 0
  %117 = vmatprep.subr.bf16.mxu0 0
  %118 = vmatpush1.bf16.msra.mxu0 0
  %119 = vmatprep.subr.bf16.mxu0 0
  %120 = vmatpush1.bf16.msra.mxu0 0
  %121 = vmatprep.subr.bf16.mxu0 0
  %122 = vmatpush1.bf16.msra.mxu0 0
  %123 = vmatprep.subr.bf16.mxu0 0
  %124 = vmatpush1.bf16.msra.mxu0 0
  %125 = vmatprep.mubr.bf16.mxu0 0
  %126 = vmatmul.mubr.bf16.gmra.mrb[0].mxu0 %v70
  %v127 = vpop.f32.mrb[0].mxu0
  %v128 = vadd.f32 %v54, %v127
  %v129 = vpop.f32.mrb[0].mxu0
  %v130 = vpop.f32.mrb[0].mxu0
  %v131 = vadd.f32 %v54, %v130
  %v132 = vpop.f32.mrb[0].mxu0
  %133 = vmatprep.mubr.bf16.mxu0 0
  %134 = vmatmul.mubr.bf16.gmra.mrb[0].mxu0 %v73
  %v135 = vpop.f32.mrb[0].mxu0
  %v136 = vadd.f32 %v54, %v135
  %v137 = vpop.f32.mrb[0].mxu0
  %v138 = vpop.f32.mrb[0].mxu0
  %v139 = vadd.f32 %v54, %v138
  %v140 = vpop.f32.mrb[0].mxu0
  %141 = vmatprep.mubr.bf16.mxu0 0
  %142 = vmatmul.mubr.bf16.gmra.mrb[0].mxu0 %v76
  %v143 = vpop.f32.mrb[0].mxu0
  %v144 = vadd.f32 %v54, %v143
  %v145 = vpop.f32.mrb[0].mxu0
  %v146 = vpop.f32.mrb[0].mxu0
  %v147 = vadd.f32 %v54, %v146
  %v148 = vpop.f32.mrb[0].mxu0
  %149 = vmatprep.mubr.bf16.mxu0 0
  %150 = vmatmul.mubr.bf16.gmra.mrb[0].mxu0 %v79
  %v151 = vpop.f32.mrb[0].mxu0
  %v152 = vadd.f32 %v54, %v151
  %v153 = vpop.f32.mrb[0].mxu0
  %v154 = vpop.f32.mrb[0].mxu0
  %v155 = vadd.f32 %v54, %v154
  %v156 = vpop.f32.mrb[0].mxu0
  %157 = vmatprep.mubr.bf16.mxu0 0
  %158 = vmatmul.mubr.bf16.gmra.mrb[0].mxu0 %v82
  %v159 = vpop.f32.mrb[0].mxu0
  %v160 = vadd.f32 %v54, %v159
  %v161 = vpop.f32.mrb[0].mxu0
  %v162 = vpop.f32.mrb[0].mxu0
  %v163 = vadd.f32 %v54, %v162
  %v164 = vpop.f32.mrb[0].mxu0
  %165 = vmatprep.mubr.bf16.mxu0 0
  %166 = vmatmul.mubr.bf16.gmra.mrb[0].mxu0 %v85
  %v167 = vpop.f32.mrb[0].mxu0
  %v168 = vadd.f32 %v54, %v167
  %v169 = vpop.f32.mrb[0].mxu0
  %v170 = vpop.f32.mrb[0].mxu0
  %v171 = vadd.f32 %v54, %v170
  %v172 = vpop.f32.mrb[0].mxu0
  %173 = vmatprep.mubr.bf16.mxu0 0
  %174 = vmatmul.mubr.bf16.gmra.mrb[0].mxu0 %v88
  %v175 = vpop.f32.mrb[0].mxu0
  %v176 = vadd.f32 %v54, %v175
  %v177 = vpop.f32.mrb[0].mxu0
  %v178 = vpop.f32.mrb[0].mxu0
  %v179 = vadd.f32 %v54, %v178
  %v180 = vpop.f32.mrb[0].mxu0
  %181 = vmatprep.mubr.bf16.mxu0 0
  %182 = vmatmul.mubr.bf16.gmra.mrb[0].mxu0 %v91
  %v183 = vpop.f32.mrb[0].mxu0
  %v184 = vadd.f32 %v54, %v183
  %v185 = vpop.f32.mrb[0].mxu0
  %v186 = vpop.f32.mrb[0].mxu0
  %v187 = vadd.f32 %v54, %v186
  %v188 = vpop.f32.mrb[0].mxu0
  %189 = vdwg.mxu0
  %v190 = vmax.f32 %v128, 0.0
  %v191 = vmax.f32 %v131, 0.0
  %v192 = vmax.f32 %v136, 0.0
  %v193 = vmax.f32 %v139, 0.0
  %v194 = vmax.f32 %v144, 0.0
  %v195 = vmax.f32 %v147, 0.0
  %v196 = vmax.f32 %v152, 0.0
  %v197 = vmax.f32 %v155, 0.0
  %v198 = vmax.f32 %v160, 0.0
  %v199 = vmax.f32 %v163, 0.0
  %v200 = vmax.f32 %v168, 0.0
  %v201 = vmax.f32 %v171, 0.0
  %v202 = vmax.f32 %v176, 0.0
  %v203 = vmax.f32 %v179, 0.0
  %v204 = vmax.f32 %v184, 0.0
  %v205 = vmax.f32 %v187, 0.0
  %v206 = vpack.c.bf16 %v191, %v190
  %v207 = vpack.c.bf16 %v193, %v192
  %v208 = vpack.c.bf16 %v195, %v194
  %v209 = vpack.c.bf16 %v197, %v196
  %v210 = vpack.c.bf16 %v199, %v198
  %v211 = vpack.c.bf16 %v201, %v200
  %v212 = vpack.c.bf16 %v203, %v202
  %v213 = vpack.c.bf16 %v205, %v204
  %v214 = vld [vmem:[%s3] sm:$0xf]
  %v215 = vld [vmem:[%s3 + $0x4] sm:$0xf]
  %v216 = vld [vmem:[%s3 + $0x8] sm:$0xf]
  %v217 = vld [vmem:[%s3 + $0xc] sm:$0xf]
  %v218 = vld [vmem:[%s3 + $0x10] sm:$0xf]
  %v219 = vld [vmem:[%s3 + $0x14] sm:$0xf]
  %v220 = vld [vmem:[%s3 + $0x18] sm:$0xf]
  %v221 = vld [vmem:[%s3 + $0x1c] sm:$0xf]
  %v222 = vld [vmem:[%s3 + $0x20] sm:$0xf]
  %v223 = vld [vmem:[%s3 + $0x24] sm:$0xf]
  %v224 = vld [vmem:[%s3 + $0x28] sm:$0xf]
  %v225 = vld [vmem:[%s3 + $0x2c] sm:$0xf]
  %v226 = vld [vmem:[%s3 + $0x30] sm:$0xf]
  %v227 = vld [vmem:[%s3 + $0x34] sm:$0xf]
  %v228 = vld [vmem:[%s3 + $0x38] sm:$0xf]
  %v229 = vld [vmem:[%s3 + $0x3c] sm:$0xf]
  %v230 = vld [vmem:[%s4] sm:$0x1]
  %v232 = vlaneseq
  %v233 = vshrl.u32 %v232, 7
  %v234 = vsub.s32 0, %v233
  %v235 = vrot.slane %v230, %v234
  %v253 = vunpack.c.l.b16 %v214
  %v254 = vunpack.c.l.b16 %v215
  %v255 = vunpack.c.l.b16 %v216
  %v256 = vunpack.c.l.b16 %v217
  %v257 = vunpack.c.l.b16 %v218
  %v258 = vunpack.c.l.b16 %v219
  %v259 = vunpack.c.l.b16 %v220
  %v260 = vunpack.c.l.b16 %v221
  %v261 = vunpack.c.l.b16 %v222
  %v262 = vunpack.c.l.b16 %v223
  %v263 = vunpack.c.l.b16 %v224
  %v264 = vunpack.c.l.b16 %v225
  %v265 = vunpack.c.l.b16 %v226
  %v266 = vunpack.c.l.b16 %v227
  %v267 = vunpack.c.l.b16 %v228
  %v268 = vunpack.c.l.b16 %v229
  %v269 = vpack.c.b16 %v254, %v253
  %v270 = vpack.c.b16 %v256, %v255
  %v271 = vpack.c.b16 %v258, %v257
  %v272 = vpack.c.b16 %v260, %v259
  %v273 = vpack.c.b16 %v262, %v261
  %v274 = vpack.c.b16 %v264, %v263
  %v275 = vpack.c.b16 %v266, %v265
  %v276 = vpack.c.b16 %v268, %v267
  %285 = vmatprep.subr.bf16.mxu0 0
  %286 = vmatpush1.bf16.msra.mxu0 %v269
  %287 = vmatprep.subr.bf16.mxu0 0
  %288 = vmatpush1.bf16.msra.mxu0 %v270
  %289 = vmatprep.subr.bf16.mxu0 0
  %290 = vmatpush1.bf16.msra.mxu0 %v271
  %291 = vmatprep.subr.bf16.mxu0 0
  %292 = vmatpush1.bf16.msra.mxu0 %v272
  %293 = vmatprep.subr.bf16.mxu0 0
  %294 = vmatpush1.bf16.msra.mxu0 %v273
  %295 = vmatprep.subr.bf16.mxu0 0
  %296 = vmatpush1.bf16.msra.mxu0 %v274
  %297 = vmatprep.subr.bf16.mxu0 0
  %298 = vmatpush1.bf16.msra.mxu0 %v275
  %299 = vmatprep.subr.bf16.mxu0 0
  %300 = vmatpush1.bf16.msra.mxu0 %v276
  %301 = vmatprep.subr.bf16.mxu0 0
  %302 = vmatpush1.bf16.msra.mxu0 0
  %303 = vmatprep.subr.bf16.mxu0 0
  %304 = vmatpush1.bf16.msra.mxu0 0
  %305 = vmatprep.subr.bf16.mxu0 0
  %306 = vmatpush1.bf16.msra.mxu0 0
  %307 = vmatprep.subr.bf16.mxu0 0
  %308 = vmatpush1.bf16.msra.mxu0 0
  %309 = vmatprep.subr.bf16.mxu0 0
  %310 = vmatpush1.bf16.msra.mxu0 0
  %311 = vmatprep.subr.bf16.mxu0 0
  %312 = vmatpush1.bf16.msra.mxu0 0
  %313 = vmatprep.subr.bf16.mxu0 0
  %314 = vmatpush1.bf16.msra.mxu0 0
  %315 = vmatprep.subr.bf16.mxu0 0
  %316 = vmatpush1.bf16.msra.mxu0 0
  %317 = vmatprep.mubr.bf16.mxu0 0
  %318 = vmatmul.mubr.bf16.gmra.mrb[0].mxu0 %v206
  %v319 = vpop.f32.mrb[0].mxu0
  %v320 = vadd.f32 %v235, %v319
  %v321 = vpop.f32.mrb[0].mxu0
  %v322 = vpop.f32.mrb[0].mxu0
  %v323 = vadd.f32 %v235, %v322
  %v324 = vpop.f32.mrb[0].mxu0
  %325 = vmatprep.mubr.bf16.mxu0 0
  %326 = vmatmul.mubr.bf16.gmra.mrb[0].mxu0 %v207
  %v327 = vpop.f32.mrb[0].mxu0
  %v328 = vadd.f32 %v235, %v327
  %v329 = vpop.f32.mrb[0].mxu0
  %v330 = vpop.f32.mrb[0].mxu0
  %v331 = vadd.f32 %v235, %v330
  %v332 = vpop.f32.mrb[0].mxu0
  %333 = vmatprep.mubr.bf16.mxu0 0
  %334 = vmatmul.mubr.bf16.gmra.mrb[0].mxu0 %v208
  %v335 = vpop.f32.mrb[0].mxu0
  %v336 = vadd.f32 %v235, %v335
  %v337 = vpop.f32.mrb[0].mxu0
  %v338 = vpop.f32.mrb[0].mxu0
  %v339 = vadd.f32 %v235, %v338
  %v340 = vpop.f32.mrb[0].mxu0
  %341 = vmatprep.mubr.bf16.mxu0 0
  %342 = vmatmul.mubr.bf16.gmra.mrb[0].mxu0 %v209
  %v343 = vpop.f32.mrb[0].mxu0
  %v344 = vadd.f32 %v235, %v343
  %v345 = vpop.f32.mrb[0].mxu0
  %v346 = vpop.f32.mrb[0].mxu0
  %v347 = vadd.f32 %v235, %v346
  %v348 = vpop.f32.mrb[0].mxu0
  %349 = vmatprep.mubr.bf16.mxu0 0
  %350 = vmatmul.mubr.bf16.gmra.mrb[0].mxu0 %v210
  %v351 = vpop.f32.mrb[0].mxu0
  %v352 = vadd.f32 %v235, %v351
  %v353 = vpop.f32.mrb[0].mxu0
  %v354 = vpop.f32.mrb[0].mxu0
  %v355 = vadd.f32 %v235, %v354
  %v356 = vpop.f32.mrb[0].mxu0
  %357 = vmatprep.mubr.bf16.mxu0 0
  %358 = vmatmul.mubr.bf16.gmra.mrb[0].mxu0 %v211
  %v359 = vpop.f32.mrb[0].mxu0
  %v360 = vadd.f32 %v235, %v359
  %v361 = vpop.f32.mrb[0].mxu0
  %v362 = vpop.f32.mrb[0].mxu0
  %v363 = vadd.f32 %v235, %v362
  %v364 = vpop.f32.mrb[0].mxu0
  %365 = vmatprep.mubr.bf16.mxu0 0
  %366 = vmatmul.mubr.bf16.gmra.mrb[0].mxu0 %v212
  %v367 = vpop.f32.mrb[0].mxu0
  %v368 = vadd.f32 %v235, %v367
  %v369 = vpop.f32.mrb[0].mxu0
  %v370 = vpop.f32.mrb[0].mxu0
  %v371 = vadd.f32 %v235, %v370
  %v372 = vpop.f32.mrb[0].mxu0
  %373 = vmatprep.mubr.bf16.mxu0 0
  %374 = vmatmul.mubr.bf16.gmra.mrb[0].mxu0 %v213
  %v375 = vpop.f32.mrb[0].mxu0
  %v376 = vadd.f32 %v235, %v375
  %v377 = vpop.f32.mrb[0].mxu0
  %v378 = vpop.f32.mrb[0].mxu0
  %v379 = vadd.f32 %v235, %v378
  %v380 = vpop.f32.mrb[0].mxu0
  %381 = vdwg.mxu0
  %382 = vmax.xlane.f32.xlu0 %v320
  %v383 = vpop.xlane.xlu0 %382
  %384 = vmax.xlane.f32.xlu0 %v323
  %v385 = vpop.xlane.xlu0 %384
  %386 = vmax.xlane.f32.xlu0 %v328
  %v387 = vpop.xlane.xlu0 %386
  %388 = vmax.xlane.f32.xlu0 %v331
  %v389 = vpop.xlane.xlu0 %388
  %390 = vmax.xlane.f32.xlu0 %v336
  %v391 = vpop.xlane.xlu0 %390
  %392 = vmax.xlane.f32.xlu0 %v339
  %v393 = vpop.xlane.xlu0 %392
  %394 = vmax.xlane.f32.xlu0 %v344
  %v395 = vpop.xlane.xlu0 %394
  %396 = vmax.xlane.f32.xlu0 %v347
  %v397 = vpop.xlane.xlu0 %396
  %398 = vmax.xlane.f32.xlu0 %v352
  %v399 = vpop.xlane.xlu0 %398
  %400 = vmax.xlane.f32.xlu0 %v355
  %v401 = vpop.xlane.xlu0 %400
  %402 = vmax.xlane.f32.xlu0 %v360
  %v403 = vpop.xlane.xlu0 %402
  %404 = vmax.xlane.f32.xlu0 %v363
  %v405 = vpop.xlane.xlu0 %404
  %406 = vmax.xlane.f32.xlu0 %v368
  %v407 = vpop.xlane.xlu0 %406
  %408 = vmax.xlane.f32.xlu0 %v371
  %v409 = vpop.xlane.xlu0 %408
  %410 = vmax.xlane.f32.xlu0 %v376
  %v411 = vpop.xlane.xlu0 %410
  %412 = vmax.xlane.f32.xlu0 %v379
  %v413 = vpop.xlane.xlu0 %412
  %v414 = vsub.f32 %v320, %v383
  %v415 = vsub.f32 %v323, %v385
  %v416 = vsub.f32 %v328, %v387
  %v417 = vsub.f32 %v331, %v389
  %v418 = vsub.f32 %v336, %v391
  %v419 = vsub.f32 %v339, %v393
  %v420 = vsub.f32 %v344, %v395
  %v421 = vsub.f32 %v347, %v397
  %v422 = vsub.f32 %v352, %v399
  %v423 = vsub.f32 %v355, %v401
  %v424 = vsub.f32 %v360, %v403
  %v425 = vsub.f32 %v363, %v405
  %v426 = vsub.f32 %v368, %v407
  %v427 = vsub.f32 %v371, %v409
  %v428 = vsub.f32 %v376, %v411
  %v429 = vsub.f32 %v379, %v413
  %v430 = vmul.f32 %v414, 1.442695
  %v431 = vpow.pop %v430
  %v432 = vmul.f32 %v415, 1.442695
  %v433 = vpow.pop %v432
  %v434 = vmul.f32 %v416, 1.442695
  %v435 = vpow.pop %v434
  %v436 = vmul.f32 %v417, 1.442695
  %v437 = vpow.pop %v436
  %v438 = vmul.f32 %v418, 1.442695
  %v439 = vpow.pop %v438
  %v440 = vmul.f32 %v419, 1.442695
  %v441 = vpow.pop %v440
  %v442 = vmul.f32 %v420, 1.442695
  %v443 = vpow.pop %v442
  %v444 = vmul.f32 %v421, 1.442695
  %v445 = vpow.pop %v444
  %v446 = vmul.f32 %v422, 1.442695
  %v447 = vpow.pop %v446
  %v448 = vmul.f32 %v423, 1.442695
  %v449 = vpow.pop %v448
  %v450 = vmul.f32 %v424, 1.442695
  %v451 = vpow.pop %v450
  %v452 = vmul.f32 %v425, 1.442695
  %v453 = vpow.pop %v452
  %v454 = vmul.f32 %v426, 1.442695
  %v455 = vpow.pop %v454
  %v456 = vmul.f32 %v427, 1.442695
  %v457 = vpow.pop %v456
  %v458 = vmul.f32 %v428, 1.442695
  %v459 = vpow.pop %v458
  %v460 = vmul.f32 %v429, 1.442695
  %v461 = vpow.pop %v460
  %462 = vadd.xlane.f32.xlu0 %v431
  %v463 = vpop.xlane.xlu0 %462
  %464 = vadd.xlane.f32.xlu0 %v433
  %v465 = vpop.xlane.xlu0 %464
  %466 = vadd.xlane.f32.xlu0 %v435
  %v467 = vpop.xlane.xlu0 %466
  %468 = vadd.xlane.f32.xlu0 %v437
  %v469 = vpop.xlane.xlu0 %468
  %470 = vadd.xlane.f32.xlu0 %v439
  %v471 = vpop.xlane.xlu0 %470
  %472 = vadd.xlane.f32.xlu0 %v441
  %v473 = vpop.xlane.xlu0 %472
  %474 = vadd.xlane.f32.xlu0 %v443
  %v475 = vpop.xlane.xlu0 %474
  %476 = vadd.xlane.f32.xlu0 %v445
  %v477 = vpop.xlane.xlu0 %476
  %478 = vadd.xlane.f32.xlu0 %v447
  %v479 = vpop.xlane.xlu0 %478
  %480 = vadd.xlane.f32.xlu0 %v449
  %v481 = vpop.xlane.xlu0 %480
  %482 = vadd.xlane.f32.xlu0 %v451
  %v483 = vpop.xlane.xlu0 %482
  %484 = vadd.xlane.f32.xlu0 %v453
  %v485 = vpop.xlane.xlu0 %484
  %486 = vadd.xlane.f32.xlu0 %v455
  %v487 = vpop.xlane.xlu0 %486
  %488 = vadd.xlane.f32.xlu0 %v457
  %v489 = vpop.xlane.xlu0 %488
  %490 = vadd.xlane.f32.xlu0 %v459
  %v491 = vpop.xlane.xlu0 %490
  %492 = vadd.xlane.f32.xlu0 %v461
  %v493 = vpop.xlane.xlu0 %492
  %v494 = vrcp.pop %v463
  %v495 = vmul.f32 %v431, %v494
  %v496 = vrcp.pop %v465
  %v497 = vmul.f32 %v433, %v496
  %v498 = vrcp.pop %v467
  %v499 = vmul.f32 %v435, %v498
  %v500 = vrcp.pop %v469
  %v501 = vmul.f32 %v437, %v500
  %v502 = vrcp.pop %v471
  %v503 = vmul.f32 %v439, %v502
  %v504 = vrcp.pop %v473
  %v505 = vmul.f32 %v441, %v504
  %v506 = vrcp.pop %v475
  %v507 = vmul.f32 %v443, %v506
  %v508 = vrcp.pop %v477
  %v509 = vmul.f32 %v445, %v508
  %v510 = vrcp.pop %v479
  %v511 = vmul.f32 %v447, %v510
  %v512 = vrcp.pop %v481
  %v513 = vmul.f32 %v449, %v512
  %v514 = vrcp.pop %v483
  %v515 = vmul.f32 %v451, %v514
  %v516 = vrcp.pop %v485
  %v517 = vmul.f32 %v453, %v516
  %v518 = vrcp.pop %v487
  %v519 = vmul.f32 %v455, %v518
  %v520 = vrcp.pop %v489
  %v521 = vmul.f32 %v457, %v520
  %v522 = vrcp.pop %v491
  %v523 = vmul.f32 %v459, %v522
  %v524 = vrcp.pop %v493
  %v525 = vmul.f32 %v461, %v524
  %526 = vst [vmem:[%s5] sm:$0xff] %v495
  %527 = vst [vmem:[%s5 + $0x8] sm:$0xff] %v497
  %528 = vst [vmem:[%s5 + $0x10] sm:$0xff] %v499
  %529 = vst [vmem:[%s5 + $0x18] sm:$0xff] %v501
  %530 = vst [vmem:[%s5 + $0x20] sm:$0xff] %v503
  %531 = vst [vmem:[%s5 + $0x28] sm:$0xff] %v505
  %532 = vst [vmem:[%s5 + $0x30] sm:$0xff] %v507
  %533 = vst [vmem:[%s5 + $0x38] sm:$0xff] %v509
  %534 = vst [vmem:[%s5 + $0x40] sm:$0xff] %v511
  %535 = vst [vmem:[%s5 + $0x48] sm:$0xff] %v513
  %536 = vst [vmem:[%s5 + $0x50] sm:$0xff] %v515
  %537 = vst [vmem:[%s5 + $0x58] sm:$0xff] %v517
  %538 = vst [vmem:[%s5 + $0x60] sm:$0xff] %v519
  %539 = vst [vmem:[%s5 + $0x68] sm:$0xff] %v521
  %540 = vst [vmem:[%s5 + $0x70] sm:$0xff] %v523
  %541 = vst [vmem:[%s5 + $0x78] sm:$0xff] %v525
  // Predicated region
  $region22: #{learner_forward.1} parent=0 // pred_check
    _
  $region23: #{learner_forward.1} parent=0 // pred_check_branch
    %543 = sbr.rel (0) target = $region25
  $region24: #{learner_forward.1} parent=0 // pred_region
    _
  $region25: #{learner_forward.1} parent=0 // pred_fallthru
    _
  // Predicated region
  $region26: #{learner_forward.1} parent=0 // pred_check
    _
  $region27: #{learner_forward.1} parent=0 // pred_check_branch
    %545 = sbr.rel (0) target = $region29
  $region28: #{learner_forward.1} parent=0 // pred_region
    _
  $region29: #{learner_forward.1} parent=0 // pred_fallthru
    _

</llo_original>
